<compile_context>
chip_gen: v7x
topology: tpu7x:2x2x1
jax: 0.10.0
libtpu: 0.0.40
codegen_flags: <defaults>
</compile_context>

<pallas_src>
import math

import jax
import jax.numpy as jnp
from jax.experimental import pallas as pl
from jax.experimental.pallas import tpu as pltpu


def _scale_kernel(scale_ref, x_ref, o_ref):
    # scale_ref: SMEM (1,) f32 learnable scalar parameter.
    # x_ref / o_ref: VMEM (tm, L) tiles of the flattened, lane-dense input.
    s = scale_ref[0]
    o_ref[...] = (x_ref[...].astype(jnp.float32) * s).astype(o_ref.dtype)


def _round_up(n, m):
    return ((n + m - 1) // m) * m


def _vmem_capacity_bytes():
    try:
        info = pltpu.get_tpu_info()
        return int(getattr(info, "vmem_capacity_bytes", 128 << 20))
    except Exception:
        return 128 << 20


def _scale_fallback(x, scale):
    # XLA's fused elementwise multiply is already at HBM roofline; used for
    # ragged totals (avoids pad + slice extra HBM passes) and non-float dtypes.
    s = scale[0]
    if jnp.issubdtype(x.dtype, jnp.floating):
        return (x.astype(jnp.float32) * s.astype(jnp.float32)).astype(x.dtype)
    return x * s  # integer / bool inputs: promote like PyTorch (int * f32 -> f32)


def scale_forward(x, scale, *, lane_width=1024, max_block_rows=None, donate=False):
    """Multiply `x` (any shape) by the learnable scalar `scale` (shape (1,))."""
    orig_shape = x.shape
    dtype = x.dtype
    total = math.prod(orig_shape)
    L = lane_width  # lane-dense last dim, multiple of 128

    scale = jnp.asarray(scale, jnp.float32).reshape(1)

    # Ragged totals / non-float dtypes / empty tensors: plain XLA multiply.
    if total == 0 or (total % L) != 0 or not jnp.issubdtype(dtype, jnp.floating):
        return _scale_fallback(x, scale)

    rows = total // L
    itemsize = jnp.dtype(dtype).itemsize
    sublane = {4: 8, 2: 16, 1: 32}.get(itemsize, 8)

    # --- Byte-budgeted, generation-aware block sizing --------------------
    vmem_cap = _vmem_capacity_bytes()
    if vmem_cap <= (64 << 20):          # v7x: 64 MiB VMEM, ~3.2 TB/s HBM
        block_bytes = 8 << 20           # bigger blocks to hide per-step overhead
        vmem_limit = 44 << 20           # 4 buffers * 8 MiB = 32 MiB + headroom
    else:                               # v5e / v6e: 128 MiB VMEM
        block_bytes = 4 << 20           # 4 buffers * 4 MiB = 16 MiB
        vmem_limit = 32 << 20           # above v5e's 16 MiB default, well in physical

    budget_rows = max(sublane, (block_bytes // (L * itemsize)) // sublane * sublane)
    if max_block_rows is not None:      # explicit override (testing / tuning)
        budget_rows = max(sublane, (max_block_rows // sublane) * sublane)

    tm = min(rows, budget_rows)
    # Give the single "parallel" grid axis >= ~4 steps when possible so both
    # v7x TensorCores stay busy and the pipeline keeps double-buffer overlap.
    if rows >= 4 * sublane:
        tm = min(tm, _round_up(pl.cdiv(rows, 4), sublane))
    # Block validity: tm must equal the full row dim or be sublane-aligned.
    if tm != rows:
        tm = max(sublane, (tm // sublane) * sublane)

    grid = (pl.cdiv(rows, tm),)         # partial last block handled by masking

    x2d = x.reshape(rows, L)            # no padding, no extra HBM copies

    call_kwargs = {}
    if donate:
        # Caller donates x: output buffer aliases the (reshaped) input slab.
        call_kwargs["input_output_aliases"] = {1: 0}

    out2d = pl.pallas_call(
        _scale_kernel,
        out_shape=jax.ShapeDtypeStruct((rows, L), dtype),
        grid_spec=pltpu.PrefetchScalarGridSpec(
            num_scalar_prefetch=0,
            grid=grid,
            in_specs=[
                pl.BlockSpec(memory_space=pltpu.SMEM),    # scalar param
                pl.BlockSpec((tm, L), lambda i: (i, 0)),  # input tile
            ],
            out_specs=pl.BlockSpec((tm, L), lambda i: (i, 0)),
        ),
        compiler_params=pltpu.CompilerParams(
            dimension_semantics=("parallel",),            # megacore on v7x
            vmem_limit_bytes=vmem_limit,
        ),
        **call_kwargs,
    )(scale, x2d)

    return out2d.reshape(orig_shape)


if __name__ == "__main__":
    key = jax.random.PRNGKey(0)

    # Primary check: NCHW input, module default init_value=1.0 (kernel path,
    # single full block since 2*4*16*16 = 2 rows of 1024 lanes).
    x = jax.random.normal(key, (2, 4, 16, 16), dtype=jnp.float32)
    scale = jnp.array([1.0], dtype=jnp.float32)
    out = scale_forward(x, scale)
    jax.block_until_ready(out)
    assert out.shape == x.shape and out.dtype == x.dtype
    assert jnp.allclose(out, x * scale[0], atol=1e-6, rtol=1e-6)

    # Secondary check: ragged total -> fallback path (no pad/slice HBM passes).
    k2 = jax.random.PRNGKey(1)
    x2 = jax.random.normal(k2, (2, 3, 7, 5), dtype=jnp.float32)
    scale2 = jnp.array([0.75], dtype=jnp.float32)
    out2 = scale_forward(x2, scale2)
    jax.block_until_ready(out2)
    assert out2.shape == x2.shape and out2.dtype == x2.dtype
    assert jnp.allclose(out2, x2 * scale2[0], atol=1e-6, rtol=1e-6)

    # Tertiary check: bf16 input stays bf16 (f32 math inside, single rounding).
    x3 = jax.random.normal(k2, (2, 4, 16, 16), dtype=jnp.bfloat16)
    out3 = scale_forward(x3, scale2)
    jax.block_until_ready(out3)
    assert out3.dtype == jnp.bfloat16
    assert jnp.allclose(
        out3.astype(jnp.float32),
        (x3.astype(jnp.float32) * 0.75).astype(jnp.bfloat16).astype(jnp.float32),
        atol=1e-2, rtol=1e-2)

    # Quaternary check: multi-block grid with a masked partial last block
    # (rows=40, forced 16-row blocks -> grid of 3 with an 8-row tail).
    x4 = jax.random.normal(key, (5, 8, 32, 32), dtype=jnp.float32)
    scale4 = jnp.array([-1.25], dtype=jnp.float32)
    out4 = scale_forward(x4, scale4, max_block_rows=16)
    jax.block_until_ready(out4)
    assert jnp.allclose(out4, x4 * scale4[0], atol=1e-6, rtol=1e-6)

    print("KERNEL_OK")
</pallas_src>

<mosaic_0001>
module attributes {stable_mosaic.version = 11 : i64} {
  func.func @_scale_kernel(%arg0: i32, %arg1: memref<1xf32, #tpu.memory_space<smem>>, %arg2: memref<2x1024xf32, #tpu.memory_space<vmem>>, %arg3: memref<2x1024xf32, #tpu.memory_space<vmem>>) attributes {dimension_semantics = [#tpu.dimension_semantics<parallel>], iteration_bounds = array<i64: 1>, scalar_prefetch = 0 : i64, scratch_operands = 0 : i64, tpu.core_type = #tpu.core_type<tc>, window_params = [{transform_indices = @transform_0, window_bounds = array<i64: 1>}, {transform_indices = @transform_1, window_bounds = array<i64: 2, 1024>}, {transform_indices = @transform_2, window_bounds = array<i64: 2, 1024>}]} {
    %c0 = arith.constant 0 : index
    %0 = memref.load %arg1[%c0] : memref<1xf32, #tpu.memory_space<smem>>
    %c0_0 = arith.constant 0 : index
    %c0_1 = arith.constant 0 : index
    %1 = vector.load %arg2[%c0_0, %c0_1] : memref<2x1024xf32, #tpu.memory_space<vmem>>, vector<2x1024xf32>
    %2 = vector.broadcast %0 : f32 to vector<2x1024xf32>
    %3 = arith.mulf %1, %2 : vector<2x1024xf32>
    %c0_2 = arith.constant 0 : index
    %c0_3 = arith.constant 0 : index
    %4 = vector.load %arg3[%c0_2, %c0_3] : memref<2x1024xf32, #tpu.memory_space<vmem>>, vector<2x1024xf32>
    tpu.vector_store %arg3[%c0_2, %c0_3], %3 {strides = array<i32>} : memref<2x1024xf32, #tpu.memory_space<vmem>>, vector<2x1024xf32>,
    return
  }
  func.func @transform_0(%arg0: i32) -> i32 {
    %c0_i32 = arith.constant 0 : i32
    %c0_i32_0 = arith.constant 0 : i32
    return %c0_i32 : i32
  }
  func.func @transform_1(%arg0: i32) -> (i32, i32) {
    %c0_i32 = arith.constant 0 : i32
    %c0_i32_0 = arith.constant 0 : i32
    return %arg0, %c0_i32 : i32, i32
  }
  func.func @transform_2(%arg0: i32) -> (i32, i32) {
    %c0_i32 = arith.constant 0 : i32
    %c0_i32_0 = arith.constant 0 : i32
    return %arg0, %c0_i32 : i32, i32
  }
}

</mosaic_0001>

<llo_original>
// kernel: tpu_custom_call.1
$region0: #{tpu_custom_call.1}
  #allocation0 [shape = 'u32[]', space=smem, size = 0x4, offset = 0x4, fixed_abs, tag = 'smem constant byte address 0x4 - core index']
  #allocation1 [shape = 'u32[144,128]{1,0:T(1,128)}', space=vmem, size = 0x12000, scoped, tag = 'internal scratch']
  #allocation2 [shape = 'f32[1]{0:T(128)S(6)}', space=smem, size = 0x200, scoped, tag = 'scoped memory for tpu_custom_call.1']
  %s0 = inlined_call_operand.<no memory space> [shape: f32[1], index: 0, kind: input, shape index: {}]
  %s1 = inlined_call_operand.hbm [shape: f32[2,1024], index: 1, kind: input, shape index: {}]
  %s2 = inlined_call_operand.hbm [shape: f32[2,1024], index: 2, kind: output, shape index: {}]
  %s3 = sld [smem:[#allocation0]]
  $region22: #{tpu_custom_call.1} parent=0
    _
  %s5 = ssub.s32 1, %s3
  %s6 = scalar_select 0, %s5, %s3
  %7 = sst [smem:[#allocation2]] %s0
  $region1: #{tpu_custom_call.1} parent=0
    #allocation3 [shape = 'u8[8192]{0}', space=vmem, size = 0x2000, scoped, tag = 'input window, operand 1, single buffered']
    #allocation4 [shape = 's32[1]{0}', space=sflag, size = 0x4, scoped, tag = 'scoped memory for tpu_custom_call.1']
    #allocation5 [shape = 's32[1]{0}', space=sflag, size = 0x4, scoped, tag = 'scoped memory for tpu_custom_call.1']
    #allocation6 [shape = 'u8[8192]{0}', space=vmem, size = 0x2000, scoped, tag = 'output window, operand 0, single buffered']
    %8 = vsyncpa [#allocation4], 0
    %9 = vsyncpa [#allocation5], 0
    // Predicated region
    $region2: #{tpu_custom_call.1} parent=1 // pred_check
      _
    $region3: #{tpu_custom_call.1} parent=1 // pred_check_branch
      %11 = sbr.rel (0) target = $region5
    $region4: #{tpu_custom_call.1} parent=1 // pred_region
      _
    $region5: #{tpu_custom_call.1} parent=1 // pred_fallthru
      _
    // Predicated region
    $region6: #{tpu_custom_call.1} parent=1 // pred_check
      _
    $region7: #{tpu_custom_call.1} parent=1 // pred_check_branch
      %13 = sbr.rel (0) target = $region9
    $region8: #{tpu_custom_call.1} parent=1 // pred_region
      %s15 = ssub.s32 256, 256
      %16 = vsyncadd [#allocation4], %s15
      %s18 = sshll.u32 [#allocation3], 4
      %s19 = int_to_ptr.vmem [resolvable:$true] %s18
      %21 = dma.hbm_to_vmem [thread:$0]  %s1, 256, %s19, [#allocation4]
    $region9: #{tpu_custom_call.1} parent=1 // pred_fallthru
      _
    // Predicated region
    $region10: #{tpu_custom_call.1} parent=1 // pred_check
      _
    $region11: #{tpu_custom_call.1} parent=1 // pred_check_branch
      %23 = sbr.rel (0) target = $region13
    $region12: #{tpu_custom_call.1} parent=1 // pred_region
      %24 = dma.done [#allocation4], 256
    $region13: #{tpu_custom_call.1} parent=1 // pred_fallthru
      _
    %s25 = sld [smem:[#allocation2]]
    %v26 = vld [vmem:[#allocation3] sm:$0xff]
    %v27 = vld [vmem:[#allocation3 + $0x8] sm:$0xff]
    %v28 = vstv %s25
    %v29 = vmul.f32 %v26, %v28
    %v30 = vmul.f32 %v27, %v28
    %31 = vst [vmem:[#allocation6] sm:$0xff] %v29
    %32 = vst [vmem:[#allocation6 + $0x8] sm:$0xff] %v30
    // Predicated region
    $region14: #{tpu_custom_call.1} parent=1 // pred_check
      _
    $region15: #{tpu_custom_call.1} parent=1 // pred_check_branch
      %34 = sbr.rel (0) target = $region17
    $region16: #{tpu_custom_call.1} parent=1 // pred_region
      %s36 = ssub.s32 256, 256
      %37 = vsyncadd [#allocation5], %s36
      %s39 = sshll.u32 [#allocation6], 4
      %s40 = int_to_ptr.vmem [resolvable:$true] %s39
      %42 = dma.vmem_to_hbm [thread:$0]  %s40, 256, %s2, [#allocation5]
    $region17: #{tpu_custom_call.1} parent=1 // pred_fallthru
      _
    // Predicated region
    $region18: #{tpu_custom_call.1} parent=1 // pred_check
      _
    $region19: #{tpu_custom_call.1} parent=1 // pred_check_branch
      %44 = sbr.rel (0) target = $region21
    $region20: #{tpu_custom_call.1} parent=1 // pred_region
      %45 = dma.done [#allocation5], 256
    $region21: #{tpu_custom_call.1} parent=1 // pred_fallthru
      _
    %46 = vsyncpa [#allocation4], 1
    %47 = vsyncpa [#allocation5], 1

</llo_original>
